<compile_context>
chip_gen: v5e
topology: v5e:2x2
jax: 0.10.0
libtpu: 0.0.40
codegen_flags: <defaults>
</compile_context>

<pallas_src>
import functools
import math

import jax
import jax.numpy as jnp
from jax.experimental import pallas as pl
from jax.experimental.pallas import tpu as pltpu


# ----------------------------------------------------------------------------
# Small helpers
# ----------------------------------------------------------------------------
def _round_up(x, m):
    return ((x + m - 1) // m) * m


def _sublane_multiple(dtype):
    # sublane tiling: f32 -> 8, bf16/f16 -> 16, int8/fp8 -> 32
    return {4: 8, 2: 16, 1: 32}.get(jnp.dtype(dtype).itemsize, 8)


def _gen_params():
    """Generation-aware VMEM budget / per-step DMA byte target."""
    kind = ""
    try:
        kind = jax.devices()[0].device_kind.lower()
    except Exception:
        pass
    if "v7" in kind:
        # v7x: 64 MiB VMEM per TC (32 MiB scoped default), ~3.2 TB/s HBM,
        # 2 TensorCores -> bigger steps + guarantee >=2 parallel grid steps.
        return dict(vmem_budget=24 << 20, vmem_limit=40 << 20,
                    step_bytes=6 << 20, min_steps=2)
    if "v5 lite" in kind or "v5e" in kind or "v5litepod" in kind:
        # v5e: 16 MiB scoped VMEM default -> stay conservative.
        return dict(vmem_budget=10 << 20, vmem_limit=16 << 20,
                    step_bytes=3 << 20, min_steps=1)
    # v6e (and unknown): 32 MiB scoped default, 128 MiB physical.
    return dict(vmem_budget=24 << 20, vmem_limit=32 << 20,
                step_bytes=3 << 20, min_steps=1)


# ----------------------------------------------------------------------------
# Kernel bodies
# ----------------------------------------------------------------------------
def _inv_norm(xf, p, eps, axis):
    """1 / max(||x||_p, eps) along `axis` (keepdims), computed in f32."""
    if p == 2:
        ss = jnp.sum(xf * xf, axis=axis, keepdims=True)
        # max(sqrt(ss), eps) == sqrt(max(ss, eps^2)); rsqrt runs on the EUP.
        return jax.lax.rsqrt(jnp.maximum(ss, jnp.float32(eps) ** 2))
    if p == 1:
        s = jnp.sum(jnp.abs(xf), axis=axis, keepdims=True)
        return 1.0 / jnp.maximum(s, jnp.float32(eps))
    # generic p: strength-reduce small integer powers to repeated multiplies
    ax = jnp.abs(xf)
    if float(p) == int(p) and 1 < int(p) <= 8:
        acc = ax
        for _ in range(int(p) - 1):
            acc = acc * ax
    else:
        acc = ax ** jnp.float32(p)
    norm = jnp.sum(acc, axis=axis, keepdims=True) ** jnp.float32(1.0 / p)
    return 1.0 / jnp.maximum(norm, jnp.float32(eps))


def _normalize_channel_kernel(x_ref, o_ref, *, p, eps, half_writeback):
    # block: (bB, C, T); reduce over the channel (sublane) axis.
    x = x_ref[...]
    xf = x.astype(jnp.float32)
    inv = _inv_norm(xf, p, eps, axis=1)
    if half_writeback:
        # 16-bit path: norm reduced in f32, write-back multiply in input dtype.
        o_ref[...] = x * inv.astype(x.dtype)
    else:
        o_ref[...] = (xf * inv).astype(o_ref.dtype)


def _normalize_lastdim_kernel(x_ref, o_ref, *, p, eps, half_writeback):
    # block: (tR, D); reduce over the lane axis (XLU).
    x = x_ref[...]
    xf = x.astype(jnp.float32)
    inv = _inv_norm(xf, p, eps, axis=-1)
    if half_writeback:
        o_ref[...] = x * inv.astype(x.dtype)
    else:
        o_ref[...] = (xf * inv).astype(o_ref.dtype)


# ----------------------------------------------------------------------------
# pallas_call wrappers
# ----------------------------------------------------------------------------
def _normalize_channel(x3, p, eps, gp):
    """x3: (B, C, HW), normalize over axis=1 (never tiled: reduction axis)."""
    B, C, HW = x3.shape
    itemsize = x3.dtype.itemsize
    c_pad_io = _round_up(C, _sublane_multiple(x3.dtype))   # in/out padding
    c_pad_f32 = _round_up(C, 8)                             # f32 temps padding

    # VMEM bytes per lane column of one block: double-buffered in + out blocks
    # plus ~2 f32-sized intermediates inside the body.
    per_lane = 4 * c_pad_io * itemsize + 2 * c_pad_f32 * 4
    lanes_vmem = max(128, gp["vmem_budget"] // per_lane)
    lanes_target = max(128, gp["step_bytes"] // max(1, C * itemsize))
    lanes = min(lanes_vmem, lanes_target)
    # TODO(synk): if C is so large that even 128 lanes overflow VMEM, a
    # multi-pass accumulator over C would be needed (not realistic here).

    if lanes >= HW:
        T = HW                                    # full spatial extent
        bB = max(1, min(B, lanes // HW))          # group batches per step
    else:
        T = min(HW, max(128, (lanes // 128) * 128))   # lane tile, mult of 128
        bB = 1

    # v7x: keep both TensorCores busy if the whole tensor fits in one step.
    total_bytes = B * C * HW * itemsize
    if (gp["min_steps"] >= 2 and bB >= B and T >= HW
            and total_bytes > (256 << 10)):
        if B >= 2:
            bB = pl.cdiv(B, 2)
        elif HW >= 256:
            T = max(128, _round_up(HW // 2, 128))

    grid = (pl.cdiv(B, bB), pl.cdiv(HW, T))
    kernel = functools.partial(_normalize_channel_kernel, p=p, eps=eps,
                               half_writeback=(itemsize == 2))
    cost = pl.CostEstimate(
        flops=3 * B * C * HW,
        transcendentals=B * HW,
        bytes_accessed=2 * B * C * HW * itemsize,
    )
    return pl.pallas_call(
        kernel,
        out_shape=jax.ShapeDtypeStruct((B, C, HW), x3.dtype),
        grid_spec=pltpu.PrefetchScalarGridSpec(
            num_scalar_prefetch=0,
            grid=grid,
            in_specs=[pl.BlockSpec((bB, C, T), lambda b, s: (b, 0, s))],
            out_specs=pl.BlockSpec((bB, C, T), lambda b, s: (b, 0, s)),
        ),
        compiler_params=pltpu.CompilerParams(
            dimension_semantics=("parallel", "parallel"),
            vmem_limit_bytes=gp["vmem_limit"]),
        cost_estimate=cost,
    )(x3)


def _normalize_lastdim(x2, p, eps, gp):
    """x2: (R, D), normalize over axis=-1 (never tiled: reduction axis)."""
    R, D = x2.shape
    itemsize = x2.dtype.itemsize
    sub = _sublane_multiple(x2.dtype)
    d_pad = _round_up(D, 128)

    per_row = 4 * d_pad * itemsize + 2 * d_pad * 4
    rows_vmem = max(sub, gp["vmem_budget"] // per_row)
    rows_target = max(sub, gp["step_bytes"] // max(1, D * itemsize))
    tR = min(rows_vmem, rows_target)
    if tR >= R:
        tR = R
    else:
        tR = max(sub, (tR // sub) * sub)

    # v7x: split rows if the whole tensor would otherwise be one grid step.
    total_bytes = R * D * itemsize
    if (gp["min_steps"] >= 2 and tR >= R and R >= 2 * sub
            and total_bytes > (256 << 10)):
        half = max(sub, _round_up(pl.cdiv(R, 2), sub))
        if half < R:
            tR = half

    # TODO(synk): for D < 128 the output stores are lane-masked; repacking
    # rows into the lane axis would avoid vst.msk but changes layout plumbing.
    grid = (pl.cdiv(R, tR),)
    kernel = functools.partial(_normalize_lastdim_kernel, p=p, eps=eps,
                               half_writeback=(itemsize == 2))
    cost = pl.CostEstimate(
        flops=3 * R * D,
        transcendentals=R,
        bytes_accessed=2 * R * D * itemsize,
    )
    return pl.pallas_call(
        kernel,
        out_shape=jax.ShapeDtypeStruct((R, D), x2.dtype),
        grid_spec=pltpu.PrefetchScalarGridSpec(
            num_scalar_prefetch=0,
            grid=grid,
            in_specs=[pl.BlockSpec((tR, D), lambda r: (r, 0))],
            out_specs=pl.BlockSpec((tR, D), lambda r: (r, 0)),
        ),
        compiler_params=pltpu.CompilerParams(
            dimension_semantics=("parallel",),
            vmem_limit_bytes=gp["vmem_limit"]),
        cost_estimate=cost,
    )(x2)


def pallas_normalize(x, p=2, dim=1, eps=1e-12):
    """F.normalize(x, p=p, dim=dim) equivalent, Pallas TPU kernels."""
    if x.size == 0:
        return x
    ndim = x.ndim
    dim = dim % ndim
    gp = _gen_params()

    if dim == ndim - 1:
        # Lane-axis reduction kernel: no transpose, no layout change.
        D = x.shape[-1]
        return _normalize_lastdim(x.reshape(-1, D), p, eps, gp).reshape(x.shape)

    # Any other dim, transpose-free: a row-major reshape (free, no HBM pass)
    # to (prod(before), C, prod(after)) puts the reduced axis on sublanes.
    B = int(math.prod(x.shape[:dim]))
    C = int(x.shape[dim])
    HW = int(math.prod(x.shape[dim + 1:]))
    out = _normalize_channel(x.reshape(B, C, HW), p, eps, gp)
    return out.reshape(x.shape)


# ----------------------------------------------------------------------------
# Reference + self-test
# ----------------------------------------------------------------------------
def _reference_normalize(x, p=2, dim=1, eps=1e-12):
    xf = x.astype(jnp.float32)
    norm = jnp.sum(jnp.abs(xf) ** p, axis=dim, keepdims=True) ** (1.0 / p)
    return (xf / jnp.maximum(norm, eps)).astype(x.dtype)


if __name__ == "__main__":
    # Module has no learnable parameters; only hyperparams (p, dim).
    P, DIM = 2, 1
    key = jax.random.PRNGKey(0)

    # Primary CCVPE-style case: NCHW f32, normalize over channels (dim=1).
    x = jax.random.normal(key, (2, 4, 16, 16), dtype=jnp.float32)
    out = jax.block_until_ready(pallas_normalize(x, p=P, dim=DIM))
    ref = _reference_normalize(x, p=P, dim=DIM)
    assert out.shape == x.shape and out.dtype == x.dtype
    assert jnp.max(jnp.abs(out - ref)) < 2e-5

    # Middle dim (dim=2): exercises the transpose-free reshape path.
    out_mid = jax.block_until_ready(pallas_normalize(x, p=2, dim=2))
    ref_mid = _reference_normalize(x, p=2, dim=2)
    assert jnp.max(jnp.abs(out_mid - ref_mid)) < 2e-5

    # Last-dim (lane-reduction) path.
    x_last = jax.random.normal(jax.random.PRNGKey(2), (2, 8, 384),
                               dtype=jnp.float32)
    out_last = jax.block_until_ready(pallas_normalize(x_last, p=2, dim=-1))
    ref_last = _reference_normalize(x_last, p=2, dim=-1)
    assert jnp.max(jnp.abs(out_last - ref_last)) < 2e-5

    # bf16 input: f32 reduction, half-precision write-back.
    x_bf = jax.random.normal(jax.random.PRNGKey(3), (2, 4, 16, 16),
                             dtype=jnp.bfloat16)
    out_bf = jax.block_until_ready(pallas_normalize(x_bf, p=2, dim=1))
    ref_bf = _reference_normalize(x_bf, p=2, dim=1)
    assert jnp.max(jnp.abs(out_bf.astype(jnp.float32)
                           - ref_bf.astype(jnp.float32))) < 2e-2

    print("KERNEL_OK")
</pallas_src>

<mosaic_0001>
module attributes {stable_mosaic.version = 11 : i64} {
  func.func @_normalize_channel_kernel(%arg0: i32, %arg1: i32, %arg2: memref<2x4x256xf32, #tpu.memory_space<vmem>>, %arg3: memref<2x4x256xf32, #tpu.memory_space<vmem>>) attributes {dimension_semantics = [#tpu.dimension_semantics<parallel>, #tpu.dimension_semantics<parallel>], iteration_bounds = array<i64: 1, 1>, scalar_prefetch = 0 : i64, scratch_operands = 0 : i64, tpu.core_type = #tpu.core_type<tc>, window_params = [{transform_indices = @transform_0, window_bounds = array<i64: 2, 4, 256>}, {transform_indices = @transform_1, window_bounds = array<i64: 2, 4, 256>}]} {
    %c0 = arith.constant 0 : index
    %c0_0 = arith.constant 0 : index
    %c0_1 = arith.constant 0 : index
    %0 = vector.load %arg2[%c0, %c0_0, %c0_1] : memref<2x4x256xf32, #tpu.memory_space<vmem>>, vector<2x4x256xf32>
    %1 = arith.mulf %0, %0 : vector<2x4x256xf32>
    %cst = arith.constant dense<0.000000e+00> : vector<2x256xf32>
    %2 = vector.multi_reduction <add>, %1, %cst [1] : vector<2x4x256xf32> to vector<2x256xf32>
    %3 = vector.shape_cast %2 : vector<2x256xf32> to vector<2x1x256xf32>
    %cst_2 = arith.constant 9.99999996E-13 : f32
    %4 = arith.mulf %cst_2, %cst_2 : f32
    %5 = vector.broadcast %4 : f32 to vector<2x1x256xf32>
    %6 = arith.maximumf %3, %5 : vector<2x1x256xf32>
    %7 = math.rsqrt %6 : vector<2x1x256xf32>
    %8 = vector.broadcast %7 : vector<2x1x256xf32> to vector<2x4x256xf32>
    %9 = arith.mulf %0, %8 : vector<2x4x256xf32>
    %c0_3 = arith.constant 0 : index
    %c0_4 = arith.constant 0 : index
    %c0_5 = arith.constant 0 : index
    %10 = vector.load %arg3[%c0_3, %c0_4, %c0_5] : memref<2x4x256xf32, #tpu.memory_space<vmem>>, vector<2x4x256xf32>
    tpu.vector_store %arg3[%c0_3, %c0_4, %c0_5], %9 {strides = array<i32>} : memref<2x4x256xf32, #tpu.memory_space<vmem>>, vector<2x4x256xf32>,
    return
  }
  func.func @transform_0(%arg0: i32, %arg1: i32) -> (i32, i32, i32) {
    %c0_i32 = arith.constant 0 : i32
    %c0_i32_0 = arith.constant 0 : i32
    return %arg0, %c0_i32, %arg1 : i32, i32, i32
  }
  func.func @transform_1(%arg0: i32, %arg1: i32) -> (i32, i32, i32) {
    %c0_i32 = arith.constant 0 : i32
    %c0_i32_0 = arith.constant 0 : i32
    return %arg0, %c0_i32, %arg1 : i32, i32, i32
  }
}

</mosaic_0001>

<llo_original>
// kernel: tpu_custom_call.1
$region0: #{tpu_custom_call.1}
  #allocation0 [shape = 'u32[]', space=smem, size = 0x4, offset = 0x4, fixed_abs, tag = 'smem constant byte address 0x4 - core index']
  #allocation1 [shape = 'u32[72,128]{1,0:T(1,128)}', space=vmem, size = 0x9000, scoped, tag = 'internal scratch']
  %s0 = inlined_call_operand.hbm [shape: f32[2,4,256], index: 0, kind: input, shape index: {}]
  %s1 = inlined_call_operand.hbm [shape: f32[2,4,256], index: 1, kind: output, shape index: {}]
  %s2 = sld [smem:[#allocation0]]
  $region18: #{tpu_custom_call.1} parent=0
    _
  %s4 = ssub.s32 1, %s2
  %s5 = scalar_select 0, %s4, %s2
  $region1: #{tpu_custom_call.1} parent=0
    #allocation2 [shape = 'u8[8192]{0}', space=vmem, size = 0x2000, scoped, tag = 'input window, operand 0, single buffered']
    #allocation3 [shape = 's32[1]{0}', space=sflag, size = 0x4, scoped, tag = 'scoped memory for tpu_custom_call.1']
    #allocation4 [shape = 's32[1]{0}', space=sflag, size = 0x4, scoped, tag = 'scoped memory for tpu_custom_call.1']
    #allocation5 [shape = 'u8[8192]{0}', space=vmem, size = 0x2000, scoped, tag = 'output window, operand 0, single buffered']
    %6 = vsyncpa [#allocation3], 0
    %7 = vsyncpa [#allocation4], 0
    // Predicated region
    $region2: #{tpu_custom_call.1} parent=1 // pred_check
      _
    $region3: #{tpu_custom_call.1} parent=1 // pred_check_branch
      %9 = sbr.rel (0) target = $region5
    $region4: #{tpu_custom_call.1} parent=1 // pred_region
      %11 = vsyncadd [#allocation3], 0
      %s12 = sshll.u32 %s0, 4
      %s13 = int_to_ptr.hbm [resolvable:$true] %s12
      %s14 = sshll.u32 [#allocation2], 4
      %s15 = int_to_ptr.vmem [resolvable:$true] %s14
      %20 = dma.hbm_to_vmem [thread:$0]  %s13, 256, %s15, [#allocation3], 128, 128, 8
    $region5: #{tpu_custom_call.1} parent=1 // pred_fallthru
      _
    // Predicated region
    $region6: #{tpu_custom_call.1} parent=1 // pred_check
      _
    $region7: #{tpu_custom_call.1} parent=1 // pred_check_branch
      %22 = sbr.rel (0) target = $region9
    $region8: #{tpu_custom_call.1} parent=1 // pred_region
      %24 = dma.done [#allocation3], 256
    $region9: #{tpu_custom_call.1} parent=1 // pred_fallthru
      _
    %v25 = vld [vmem:[#allocation2] sm:$0xff]
    %v26 = vld [vmem:[#allocation2 + $0x8] sm:$0xff]
    %v27 = vmul.f32 %v25, %v25
    %v28 = vmul.f32 %v26, %v26
    %31 = vst [vmem:[#allocation1] ss:$2 sm:$0xff] %v27
    %v32 = vld.sshfl [vmem:[#allocation1] sm:$0xff pattern:$0x75316420]
    %v33 = vld.sshfl [vmem:[#allocation1 + $0x8] sm:$0xff pattern:$0x75316420]
    %s34 = scalar_lea.vmem [#allocation1], 16
    %35 = vst [vmem:[%s34] ss:$2 sm:$0xff] %v28
    %v36 = vld.sshfl [vmem:[#allocation1 + $0x10] sm:$0xff pattern:$0x75316420]
    %v37 = vld.sshfl [vmem:[#allocation1 + $0x18] sm:$0xff pattern:$0x75316420]
    %vm42 = vcmask 1043456
    %v43 = vsel %vm42, %v32, 0.0
    %v44 = vrot.slane %v43, 4
    %v45 = vadd.f32 %v43, %v44
    %v46 = vrot.slane %v45, 2
    %v47 = vadd.f32 %v45, %v46
    %v48 = vrot.slane %v47, 1
    %v49 = vadd.f32 %v47, %v48
    %v50 = vsel %vm42, %v33, 0.0
    %v51 = vrot.slane %v50, 4
    %v52 = vadd.f32 %v50, %v51
    %v53 = vrot.slane %v52, 2
    %v54 = vadd.f32 %v52, %v53
    %v55 = vrot.slane %v54, 1
    %v56 = vadd.f32 %v54, %v55
    %v57 = vsel %vm42, %v36, 0.0
    %v58 = vrot.slane %v57, 4
    %v59 = vadd.f32 %v57, %v58
    %v60 = vrot.slane %v59, 2
    %v61 = vadd.f32 %v59, %v60
    %v62 = vrot.slane %v61, 1
    %v63 = vadd.f32 %v61, %v62
    %v64 = vsel %vm42, %v37, 0.0
    %v65 = vrot.slane %v64, 4
    %v66 = vadd.f32 %v64, %v65
    %v67 = vrot.slane %v66, 2
    %v68 = vadd.f32 %v66, %v67
    %v69 = vrot.slane %v68, 1
    %v70 = vadd.f32 %v68, %v69
    %v71 = vmax.f32 %v49, 1e-24
    %v72 = vmax.f32 %v56, 1e-24
    %v73 = vmax.f32 %v63, 1e-24
    %v74 = vmax.f32 %v70, 1e-24
    %v75 = vrsqrt.pop %v71
    %v76 = vmul.f32 %v75, %v71
    %v77 = vmul.f32 %v76, %v75
    %v78 = vmul.f32 0.5, %v77
    %v79 = vsub.f32 1.5, %v78
    %v80 = vmul.f32 %v75, %v79
    %vm81 = vweird.f32 %v71
    %vm82 = vweird.f32 %v75
    %vm83 = vmor %vm81, %vm82
    %v84 = vsel %vm83, %v75, %v80
    %v85 = vrsqrt.pop %v72
    %v86 = vmul.f32 %v85, %v72
    %v87 = vmul.f32 %v86, %v85
    %v88 = vmul.f32 0.5, %v87
    %v89 = vsub.f32 1.5, %v88
    %v90 = vmul.f32 %v85, %v89
    %vm91 = vweird.f32 %v72
    %vm92 = vweird.f32 %v85
    %vm93 = vmor %vm91, %vm92
    %v94 = vsel %vm93, %v85, %v90
    %v95 = vrsqrt.pop %v73
    %v96 = vmul.f32 %v95, %v73
    %v97 = vmul.f32 %v96, %v95
    %v98 = vmul.f32 0.5, %v97
    %v99 = vsub.f32 1.5, %v98
    %v100 = vmul.f32 %v95, %v99
    %vm101 = vweird.f32 %v73
    %vm102 = vweird.f32 %v95
    %vm103 = vmor %vm101, %vm102
    %v104 = vsel %vm103, %v95, %v100
    %v105 = vrsqrt.pop %v74
    %v106 = vmul.f32 %v105, %v74
    %v107 = vmul.f32 %v106, %v105
    %v108 = vmul.f32 0.5, %v107
    %v109 = vsub.f32 1.5, %v108
    %v110 = vmul.f32 %v105, %v109
    %vm111 = vweird.f32 %v74
    %vm112 = vweird.f32 %v105
    %vm113 = vmor %vm111, %vm112
    %v114 = vsel %vm113, %v105, %v110
    %v119 = vrot.slane %v94, 4
    %v120 = vrot.slane %v114, 4
    %v121 = vsel %vm42, %v84, %v119
    %v122 = vsel %vm42, %v104, %v120
    %v125 = vmul.f32 %v25, %v121
    %v126 = vmul.f32 %v26, %v122
    %127 = vst [vmem:[#allocation5] sm:$0xff] %v125
    %128 = vst [vmem:[#allocation5 + $0x8] sm:$0xff] %v126
    // Predicated region
    $region10: #{tpu_custom_call.1} parent=1 // pred_check
      _
    $region11: #{tpu_custom_call.1} parent=1 // pred_check_branch
      %130 = sbr.rel (0) target = $region13
    $region12: #{tpu_custom_call.1} parent=1 // pred_region
      %132 = vsyncadd [#allocation4], 0
      %s133 = sshll.u32 [#allocation5], 4
      %s134 = int_to_ptr.vmem [resolvable:$true] %s133
      %s135 = sshll.u32 %s1, 4
      %s136 = int_to_ptr.hbm [resolvable:$true] %s135
      %141 = dma.vmem_to_hbm [thread:$0]  %s134, 256, %s136, [#allocation4], 128, 128, 8
    $region13: #{tpu_custom_call.1} parent=1 // pred_fallthru
      _
    // Predicated region
    $region14: #{tpu_custom_call.1} parent=1 // pred_check
      _
    $region15: #{tpu_custom_call.1} parent=1 // pred_check_branch
      %143 = sbr.rel (0) target = $region17
    $region16: #{tpu_custom_call.1} parent=1 // pred_region
      %145 = dma.done [#allocation4], 256
    $region17: #{tpu_custom_call.1} parent=1 // pred_fallthru
      _
    %146 = vsyncpa [#allocation3], 1
    %147 = vsyncpa [#allocation4], 1

</llo_original>
